<compile_context>
chip_gen: v7x
topology: tpu7x:2x2x1
jax: 0.10.0
libtpu: 0.0.40
codegen_flags: <defaults>
</compile_context>

<pallas_src>
import functools
import math

import jax
import jax.numpy as jnp
from jax.experimental import pallas as pl
from jax.experimental.pallas import tpu as pltpu

_WEIGHT_NAMES = ("wqkv", "bqkv", "wo", "bo", "ln1_g", "ln1_b",
                 "w1", "b1", "w2", "b2", "ln2_g", "ln2_b")


# --------------------------- in-kernel helpers --------------------------------


def _bmm(lhs3, w2d):
    """(G, S, K) @ (K, N) -> (G, S, N) on the MXU, bf16 inputs, f32 accumulation."""
    g = lhs3.shape[0]
    wb = jnp.broadcast_to(w2d, (g,) + w2d.shape)          # bf16 weight
    return jax.lax.dot_general(
        lhs3.astype(jnp.bfloat16), wb,
        dimension_numbers=(((2,), (1,)), ((0,), (0,))),
        preferred_element_type=jnp.float32)


def _layernorm(v, g, b, eps=1e-5):
    mu = jnp.mean(v, axis=-1, keepdims=True)
    var = jnp.mean(jnp.square(v - mu), axis=-1, keepdims=True)
    return (v - mu) * jax.lax.rsqrt(var + eps) * g + b


def _encoder_layers(x, wrefs, num_layers, num_heads):
    """Runs `num_layers` post-LN encoder layers on x (G, S, D), fully in VMEM.

    Weight refs are stacked along a leading layer axis; the static Python loop
    unrolls over layers so the activation never leaves the kernel.
    """
    (wqkv_r, bqkv_r, wo_r, bo_r, ln1g_r, ln1b_r,
     w1_r, b1_r, w2_r, b2_r, ln2g_r, ln2b_r) = wrefs
    f32, bf16 = jnp.float32, jnp.bfloat16
    G, S, D = x.shape
    H = num_heads
    Dh = D // H

    for l in range(num_layers):
        # --- multi-head self-attention: fused QKV matmul; heads folded into the
        #     dot_general batch dim -> 2 batched dots instead of 2*H ---
        qkv = _bmm(x, wqkv_r[l]) + bqkv_r[l]                         # (G, S, 3D) f32
        q = jnp.concatenate(
            [qkv[:, :, h * Dh:(h + 1) * Dh] for h in range(H)], axis=0)
        kk = jnp.concatenate(
            [qkv[:, :, D + h * Dh:D + (h + 1) * Dh] for h in range(H)], axis=0)
        v = jnp.concatenate(
            [qkv[:, :, 2 * D + h * Dh:2 * D + (h + 1) * Dh] for h in range(H)], axis=0)
        # scores (H*G, S, S); 1/sqrt(Dh) is pre-folded into the Q weights at init.
        s = jax.lax.dot_general(q.astype(bf16), kk.astype(bf16),
                                (((2,), (2,)), ((0,), (0,))),
                                preferred_element_type=f32)
        s = s - jnp.max(s, axis=-1, keepdims=True)
        p = jnp.exp(s)
        p = p * pl.reciprocal(jnp.sum(p, axis=-1, keepdims=True), approx=True)
        av = jax.lax.dot_general(p.astype(bf16), v.astype(bf16),
                                 (((2,), (1,)), ((0,), (0,))),
                                 preferred_element_type=f32)          # (H*G, S, Dh)
        attn = jnp.concatenate([av[h * G:(h + 1) * G] for h in range(H)], axis=-1)
        attn = _bmm(attn, wo_r[l]) + bo_r[l]                          # (G, S, D)

        # --- residual + LN, FFN (ReLU), residual + LN (post-LN layer) ---
        x1 = _layernorm(x + attn, ln1g_r[l], ln1b_r[l])
        ff = jnp.maximum(_bmm(x1, w1_r[l]) + b1_r[l], 0.0)
        ff = _bmm(ff, w2_r[l]) + b2_r[l]
        x = _layernorm(x1 + ff, ln2g_r[l], ln2b_r[l])
    return x


# ----------------------------- Pallas kernels ---------------------------------


def _odcm_kernel(x_ref, w1_ref, b1_ref, w2_ref, b2_ref, w3_ref, b3_ref, o_ref, *, k):
    """Fused 3-stage depthwise temporal conv (+ReLU each) for the WHOLE batch.

    x (B, C, T); w1/w2 (C, k) depthwise; w3 (C, D, k) expands each channel to D
    filters; output (B, C, D, S) with S = T - 3*(k-1).
    """
    x = x_ref[...]                                            # (B, C, T)

    def dwconv(inp, w, b):                                    # valid depthwise conv + ReLU
        L = inp.shape[-1] - k + 1
        acc = w[:, 0:1] * inp[:, :, 0:L]
        for j in range(1, k):                                 # k is tiny (3): unrolled
            acc = acc + w[:, j:j + 1] * inp[:, :, j:j + L]
        return jnp.maximum(acc + b, 0.0)

    h = dwconv(x, w1_ref[...], b1_ref[...])                   # (B, C, T-k+1)
    h = dwconv(h, w2_ref[...], b2_ref[...])                   # (B, C, T-2k+2)

    w3 = w3_ref[...]                                          # (C, D, k)
    S = h.shape[-1] - k + 1
    acc = w3[None, :, :, 0:1] * h[:, :, 0:S][:, :, None, :]
    for j in range(1, k):
        acc = acc + w3[None, :, :, j:j + 1] * h[:, :, j:j + S][:, :, None, :]
    acc = acc + b3_ref[...][None, :, :, None]
    o_ref[...] = jnp.maximum(acc, 0.0)                        # (B, C, D, S)


def _encoder_stack_kernel(x_ref, *rest, num_layers, num_heads):
    """All layers of one transformer encoder stack in a single kernel."""
    wrefs, o_ref = rest[:-1], rest[-1]
    x = _encoder_layers(x_ref[...], wrefs, num_layers, num_heads)
    o_ref[...] = x.astype(o_ref.dtype)


def _ttm_decoder_kernel(x_ref, *rest, num_layers, num_heads):
    """Fused TTM encoder stack + 2-layer MLP decoder epilogue.

    Emits both the TTM activations (tracking / encoder_output) and the class
    logits, so the decoder costs no extra kernel launch or HBM round trip.
    """
    enc_refs = rest[:12]
    dw1_r, db1_r, dw2_r, db2_r = rest[12:16]
    x4_ref, logits_ref = rest[16], rest[17]

    x = _encoder_layers(x_ref[...], enc_refs, num_layers, num_heads)   # (G, M, D)
    x4_ref[...] = x.astype(x4_ref.dtype)

    M = x.shape[1]
    # decoder layer 1: flat(M*D) @ W1  ==  sum_m  x[:, m, :] @ W1[m]
    h = _bmm(x[:, 0:1, :], dw1_r[0])                                    # (G, 1, hid)
    for m in range(1, M):
        h = h + _bmm(x[:, m:m + 1, :], dw1_r[m])
    h = jnp.maximum(h + db1_r[...], 0.0)
    y = _bmm(h, dw2_r[...]) + db2_r[...]                                # (G, 1, ncls)
    logits_ref[...] = y.astype(logits_ref.dtype)


# ------------------------------- wrappers --------------------------------------


def _full_spec(arr):
    nd = arr.ndim
    return pl.BlockSpec(arr.shape, lambda *_: (0,) * nd)


def _vmem_limit_bytes():
    """Generation-aware scoped-VMEM limit (v5e/v6e: 128 MiB phys, v7x: 64 MiB)."""
    try:
        cap = int(pltpu.get_tpu_info().vmem_capacity_bytes)
    except Exception:
        cap = 64 * 1024 * 1024                      # conservative (v7x physical)
    return min(100 * 1024 * 1024, max(32 * 1024 * 1024, int(cap * 0.8)))


def _encoder_group_size(nb, s, d, h, nlayers, dff, budget):
    """Largest divisor G of nb whose per-step live VMEM fits `budget`, keeping
    at least 2 grid steps on the parallel axis (dual-TensorCore v7x)."""
    def est(g):
        io = 2 * 2 * g * s * d * 4                         # in+out blocks, 2x buffered
        act = g * s * (3 * d + 2 * d + dff) * 4            # qkv / attn / ffn intermediates
        att = 2 * h * g * s * s * 4                        # scores + probs (f32)
        wts = 2 * nlayers * (4 * d * d + 2 * d * dff) * 2  # bf16 stacked weights
        wbc = g * max(3 * d * d, d * dff) * 2              # broadcast weight copy
        return io + act + att + wts + wbc

    hi = nb // 2 if nb >= 2 else 1
    best = 1
    for g in range(1, hi + 1):
        if nb % g == 0 and est(g) <= budget:
            best = g
    return best


def odcm_forward(x, p, vmem_limit):
    B, C, T = x.shape
    k = p["w1"].shape[1]
    D = p["w3"].shape[1]
    S = T - 3 * (k - 1)
    return pl.pallas_call(
        functools.partial(_odcm_kernel, k=k),
        out_shape=jax.ShapeDtypeStruct((B, C, D, S), jnp.float32),
        compiler_params=pltpu.CompilerParams(vmem_limit_bytes=vmem_limit),
    )(x, p["w1"], p["b1"], p["w2"], p["b2"], p["w3"], p["b3"])


def encoder_stack(x, stack, num_heads, vmem_limit):
    """One pallas_call runs ALL layers of an encoder stack on VMEM-resident blocks."""
    NB, S, D = x.shape
    L = stack["wqkv"].shape[0]
    dff = stack["w1"].shape[-1]
    G = _encoder_group_size(NB, S, D, num_heads, L, dff, vmem_limit // 2)
    tok_spec = pl.BlockSpec((G, S, D), lambda i: (i, 0, 0))
    return pl.pallas_call(
        functools.partial(_encoder_stack_kernel, num_layers=L, num_heads=num_heads),
        out_shape=jax.ShapeDtypeStruct((NB, S, D), jnp.float32),
        grid=(NB // G,),
        in_specs=[tok_spec] + [_full_spec(stack[n]) for n in _WEIGHT_NAMES],
        out_specs=tok_spec,
        compiler_params=pltpu.CompilerParams(
            dimension_semantics=("parallel",), vmem_limit_bytes=vmem_limit),
    )(x, *[stack[n] for n in _WEIGHT_NAMES])


def ttm_decoder_forward(tok, stack, dec, num_heads, vmem_limit):
    B, M, D = tok.shape
    L = stack["wqkv"].shape[0]
    dff = stack["w1"].shape[-1]
    ncls = dec["w2"].shape[-1]
    G = _encoder_group_size(B, M, D, num_heads, L, dff, vmem_limit // 2)
    tok_spec = pl.BlockSpec((G, M, D), lambda i: (i, 0, 0))
    dec_names = ("w1", "b1", "w2", "b2")
    x4, logits = pl.pallas_call(
        functools.partial(_ttm_decoder_kernel, num_layers=L, num_heads=num_heads),
        out_shape=(jax.ShapeDtypeStruct((B, M, D), jnp.float32),
                   jax.ShapeDtypeStruct((B, 1, ncls), jnp.float32)),
        grid=(B // G,),
        in_specs=[tok_spec]
                 + [_full_spec(stack[n]) for n in _WEIGHT_NAMES]
                 + [_full_spec(dec[n]) for n in dec_names],
        out_specs=(tok_spec, pl.BlockSpec((G, 1, ncls), lambda i: (i, 0, 0))),
        compiler_params=pltpu.CompilerParams(
            dimension_semantics=("parallel",), vmem_limit_bytes=vmem_limit),
    )(tok, *[stack[n] for n in _WEIGHT_NAMES], *[dec[n] for n in dec_names])
    return x4, logits.reshape(B, ncls)


# ------------------------------ parameter init ---------------------------------


def _dense_init(key, shape, scale=0.02):
    return scale * jax.random.normal(key, shape, dtype=jnp.float32)


def init_stack_params(key, d_model, num_layers, num_heads, ffn_mult=4):
    dff = ffn_mult * d_model
    # 1/sqrt(Dh) softmax scale folded into the Q projection weights at init so
    # the kernel never multiplies the (S, S) score matrix on the VPU.
    scale = 1.0 / math.sqrt(d_model // num_heads)
    z = lambda *s: jnp.zeros(s, jnp.float32)
    o = lambda *s: jnp.ones(s, jnp.float32)

    def one_layer(k):
        ks = jax.random.split(k, 6)
        wq = _dense_init(ks[0], (d_model, d_model)) * scale
        wk = _dense_init(ks[1], (d_model, d_model))
        wv = _dense_init(ks[2], (d_model, d_model))
        return dict(
            wqkv=jnp.concatenate([wq, wk, wv], axis=1).astype(jnp.bfloat16),
            bqkv=z(1, 3 * d_model),            # zero bias (Q part would need *scale too)
            wo=_dense_init(ks[3], (d_model, d_model)).astype(jnp.bfloat16),
            bo=z(1, d_model),
            ln1_g=o(1, d_model), ln1_b=z(1, d_model),
            w1=_dense_init(ks[4], (d_model, dff)).astype(jnp.bfloat16), b1=z(1, dff),
            w2=_dense_init(ks[5], (dff, d_model)).astype(jnp.bfloat16), b2=z(1, d_model),
            ln2_g=o(1, d_model), ln2_b=z(1, d_model),
        )

    layers = [one_layer(k) for k in jax.random.split(key, num_layers)]
    # stack per-layer weights along a leading L axis so the whole stack runs in
    # one pallas_call (weights fit VMEM easily: ~12*D^2 bf16 per layer).
    return {n: jnp.stack([lyr[n] for lyr in layers], axis=0) for n in _WEIGHT_NAMES}


def init_eegformer_params(key, *, num_classes, in_channels, kernel_size, num_filters,
                          rtm_blocks, stm_blocks, ttm_blocks,
                          rtm_heads, stm_heads, ttm_heads, num_segments):
    keys = jax.random.split(key, 8)
    C, D, k = in_channels, num_filters, kernel_size
    z = lambda *s: jnp.zeros(s, jnp.float32)
    odcm = dict(
        w1=_dense_init(keys[0], (C, k), scale=0.5), b1=z(C, 1),
        w2=_dense_init(keys[1], (C, k), scale=0.5), b2=z(C, 1),
        w3=_dense_init(keys[2], (C, D, k), scale=0.5), b3=z(C, D),
    )
    rtm = init_stack_params(keys[3], D, rtm_blocks, rtm_heads)
    stm = init_stack_params(keys[4], D, stm_blocks, stm_heads)
    ttm = init_stack_params(keys[5], D, ttm_blocks, ttm_heads)
    dec_hidden = max(8, D // 2)
    decoder = dict(
        # w1 stored per segment (M, D, hidden) so the fused TTM kernel contracts
        # the flattened (M*D) features without an in-kernel reshape.
        w1=_dense_init(keys[6], (num_segments, D, dec_hidden)).astype(jnp.bfloat16),
        b1=z(1, dec_hidden),
        w2=_dense_init(keys[7], (dec_hidden, num_classes)).astype(jnp.bfloat16),
        b2=z(1, num_classes),
    )
    return dict(odcm=odcm, rtm=rtm, stm=stm, ttm=ttm, decoder=decoder)


# --------------------------------- forward --------------------------------------


def eegformer_forward(params, x, *, rtm_heads, stm_heads, ttm_heads, num_segments,
                      verbose=False):
    """Returns the dict of intermediate outputs, mirroring EEGformerWithTracking."""
    inter = {}
    vlim = _vmem_limit_bytes()

    # ODCM: one fused, un-gridded call over the whole batch.
    x1 = odcm_forward(x, params["odcm"], vlim)                    # (B, C, D, S)
    inter["odcm"] = x1
    B, C, D, S = x1.shape
    if verbose:
        print(f"ODCM Output Shape: {x1.shape}")

    # RTM: encoder stack over the regional (electrode) axis; tokens (B*S, C, D).
    t = jnp.transpose(x1, (0, 3, 1, 2)).reshape(B * S, C, D)
    t = encoder_stack(t, params["rtm"], rtm_heads, vlim)
    rtm_bscd = t.reshape(B, S, C, D)
    inter["rtm"] = jnp.transpose(rtm_bscd, (0, 2, 3, 1))          # tracking layout
    if verbose:
        print(f"RTM Output Shape: {inter['rtm'].shape}")

    # STM: encoder stack over the temporal axis; tokens (B*C, S, D).
    t = jnp.transpose(rtm_bscd, (0, 2, 1, 3)).reshape(B * C, S, D)
    t = encoder_stack(t, params["stm"], stm_heads, vlim)
    stm_bcsd = t.reshape(B, C, S, D)
    inter["stm"] = jnp.transpose(stm_bcsd, (0, 1, 3, 2))          # tracking layout
    if verbose:
        print(f"STM Output Shape: {inter['stm'].shape}")

    # TTM + decoder: segment-average pool, then ONE fused kernel runs the TTM
    # encoder stack AND the MLP decoder epilogue (2 outputs).
    M = num_segments
    seg_len = S // M
    seg = stm_bcsd[:, :, : M * seg_len, :].reshape(B, C, M, seg_len, D)
    tok = jnp.mean(seg, axis=(1, 3))                              # (B, M, D)
    x4, logits = ttm_decoder_forward(tok, params["ttm"], params["decoder"],
                                     ttm_heads, vlim)
    inter["ttm"] = x4
    inter["encoder_output"] = x4
    inter["output"] = logits
    if verbose:
        print(f"TTM Output Shape: {x4.shape}")
        print(f"Encoder Output Shape (Before Decoder): {x4.shape}")
        print(f"Decoder Output Shape (Final Output): {logits.shape}")
    return inter


# ----------------------------------- main ----------------------------------------

if __name__ == "__main__":
    num_classes = 3
    in_channels = 4
    kernel_size = 3
    num_filters = 32
    rtm_blocks = stm_blocks = ttm_blocks = 1
    rtm_heads = stm_heads = ttm_heads = 4
    num_segments = 4
    batch, time_len = 2, 22          # ODCM valid convs: 22 -> 20 -> 18 -> 16

    key = jax.random.PRNGKey(0)
    pkey, xkey = jax.random.split(key)
    params = init_eegformer_params(
        pkey,
        num_classes=num_classes, in_channels=in_channels, kernel_size=kernel_size,
        num_filters=num_filters, rtm_blocks=rtm_blocks, stm_blocks=stm_blocks,
        ttm_blocks=ttm_blocks, rtm_heads=rtm_heads, stm_heads=stm_heads,
        ttm_heads=ttm_heads, num_segments=num_segments,
    )
    x = jax.random.normal(xkey, (batch, in_channels, time_len), dtype=jnp.float32)

    outs = eegformer_forward(
        params, x,
        rtm_heads=rtm_heads, stm_heads=stm_heads, ttm_heads=ttm_heads,
        num_segments=num_segments, verbose=False,
    )
    outs = jax.tree_util.tree_map(jax.block_until_ready, outs)

    assert outs["odcm"].shape == (batch, in_channels, num_filters, 16)
    assert outs["rtm"].shape == outs["odcm"].shape
    assert outs["stm"].shape == outs["odcm"].shape
    assert outs["ttm"].shape == (batch, num_segments, num_filters)
    assert outs["encoder_output"].shape == outs["ttm"].shape
    assert outs["output"].shape == (batch, num_classes)
    assert bool(jnp.all(jnp.isfinite(outs["output"])))
    print("KERNEL_OK")
</pallas_src>

<mosaic_0001>
module attributes {stable_mosaic.version = 11 : i64} {
  func.func @_odcm_kernel(%arg0: memref<2x4x22xf32, #tpu.memory_space<vmem>>, %arg1: memref<4x3xf32, #tpu.memory_space<vmem>>, %arg2: memref<4x1xf32, #tpu.memory_space<vmem>>, %arg3: memref<4x3xf32, #tpu.memory_space<vmem>>, %arg4: memref<4x1xf32, #tpu.memory_space<vmem>>, %arg5: memref<4x32x3xf32, #tpu.memory_space<vmem>>, %arg6: memref<4x32xf32, #tpu.memory_space<vmem>>, %arg7: memref<2x4x32x16xf32, #tpu.memory_space<vmem>>) attributes {dimension_semantics = [], scalar_prefetch = 0 : i64, scratch_operands = 0 : i64, tpu.core_type = #tpu.core_type<tc>} {
    %c0 = arith.constant 0 : index
    %c0_0 = arith.constant 0 : index
    %c0_1 = arith.constant 0 : index
    %0 = vector.load %arg0[%c0, %c0_0, %c0_1] : memref<2x4x22xf32, #tpu.memory_space<vmem>>, vector<2x4x22xf32>
    %c0_2 = arith.constant 0 : index
    %c0_3 = arith.constant 0 : index
    %1 = vector.load %arg1[%c0_2, %c0_3] : memref<4x3xf32, #tpu.memory_space<vmem>>, vector<4x3xf32>
    %c0_4 = arith.constant 0 : index
    %c0_5 = arith.constant 0 : index
    %2 = vector.load %arg2[%c0_4, %c0_5] : memref<4x1xf32, #tpu.memory_space<vmem>>, vector<4x1xf32>
    %3 = vector.extract_strided_slice %1 {offsets = [0, 0], sizes = [4, 1], strides = [1, 1]} : vector<4x3xf32> to vector<4x1xf32>
    %4 = vector.extract_strided_slice %0 {offsets = [0, 0, 0], sizes = [2, 4, 20], strides = [1, 1, 1]} : vector<2x4x22xf32> to vector<2x4x20xf32>
    %5 = vector.shape_cast %3 : vector<4x1xf32> to vector<1x4x1xf32>
    %6 = vector.broadcast %5 : vector<1x4x1xf32> to vector<2x4x20xf32>
    %7 = arith.mulf %6, %4 : vector<2x4x20xf32>
    %8 = vector.extract_strided_slice %1 {offsets = [0, 1], sizes = [4, 1], strides = [1, 1]} : vector<4x3xf32> to vector<4x1xf32>
    %9 = vector.extract_strided_slice %0 {offsets = [0, 0, 1], sizes = [2, 4, 20], strides = [1, 1, 1]} : vector<2x4x22xf32> to vector<2x4x20xf32>
    %10 = vector.shape_cast %8 : vector<4x1xf32> to vector<1x4x1xf32>
    %11 = vector.broadcast %10 : vector<1x4x1xf32> to vector<2x4x20xf32>
    %12 = arith.mulf %11, %9 : vector<2x4x20xf32>
    %13 = arith.addf %7, %12 : vector<2x4x20xf32>
    %14 = vector.extract_strided_slice %1 {offsets = [0, 2], sizes = [4, 1], strides = [1, 1]} : vector<4x3xf32> to vector<4x1xf32>
    %15 = vector.extract_strided_slice %0 {offsets = [0, 0, 2], sizes = [2, 4, 20], strides = [1, 1, 1]} : vector<2x4x22xf32> to vector<2x4x20xf32>
    %16 = vector.shape_cast %14 : vector<4x1xf32> to vector<1x4x1xf32>
    %17 = vector.broadcast %16 : vector<1x4x1xf32> to vector<2x4x20xf32>
    %18 = arith.mulf %17, %15 : vector<2x4x20xf32>
    %19 = arith.addf %13, %18 : vector<2x4x20xf32>
    %20 = vector.shape_cast %2 : vector<4x1xf32> to vector<1x4x1xf32>
    %21 = vector.broadcast %20 : vector<1x4x1xf32> to vector<2x4x20xf32>
    %22 = arith.addf %19, %21 : vector<2x4x20xf32>
    %cst = arith.constant 0.000000e+00 : f32
    %23 = vector.broadcast %cst : f32 to vector<2x4x20xf32>
    %24 = arith.maximumf %22, %23 : vector<2x4x20xf32>
    %c0_6 = arith.constant 0 : index
    %c0_7 = arith.constant 0 : index
    %25 = vector.load %arg3[%c0_6, %c0_7] : memref<4x3xf32, #tpu.memory_space<vmem>>, vector<4x3xf32>
    %c0_8 = arith.constant 0 : index
    %c0_9 = arith.constant 0 : index
    %26 = vector.load %arg4[%c0_8, %c0_9] : memref<4x1xf32, #tpu.memory_space<vmem>>, vector<4x1xf32>
    %27 = vector.extract_strided_slice %25 {offsets = [0, 0], sizes = [4, 1], strides = [1, 1]} : vector<4x3xf32> to vector<4x1xf32>
    %28 = vector.extract_strided_slice %24 {offsets = [0, 0, 0], sizes = [2, 4, 18], strides = [1, 1, 1]} : vector<2x4x20xf32> to vector<2x4x18xf32>
    %29 = vector.shape_cast %27 : vector<4x1xf32> to vector<1x4x1xf32>
    %30 = vector.broadcast %29 : vector<1x4x1xf32> to vector<2x4x18xf32>
    %31 = arith.mulf %30, %28 : vector<2x4x18xf32>
    %32 = vector.extract_strided_slice %25 {offsets = [0, 1], sizes = [4, 1], strides = [1, 1]} : vector<4x3xf32> to vector<4x1xf32>
    %33 = vector.extract_strided_slice %24 {offsets = [0, 0, 1], sizes = [2, 4, 18], strides = [1, 1, 1]} : vector<2x4x20xf32> to vector<2x4x18xf32>
    %34 = vector.shape_cast %32 : vector<4x1xf32> to vector<1x4x1xf32>
    %35 = vector.broadcast %34 : vector<1x4x1xf32> to vector<2x4x18xf32>
    %36 = arith.mulf %35, %33 : vector<2x4x18xf32>
    %37 = arith.addf %31, %36 : vector<2x4x18xf32>
    %38 = vector.extract_strided_slice %25 {offsets = [0, 2], sizes = [4, 1], strides = [1, 1]} : vector<4x3xf32> to vector<4x1xf32>
    %39 = vector.extract_strided_slice %24 {offsets = [0, 0, 2], sizes = [2, 4, 18], strides = [1, 1, 1]} : vector<2x4x20xf32> to vector<2x4x18xf32>
    %40 = vector.shape_cast %38 : vector<4x1xf32> to vector<1x4x1xf32>
    %41 = vector.broadcast %40 : vector<1x4x1xf32> to vector<2x4x18xf32>
    %42 = arith.mulf %41, %39 : vector<2x4x18xf32>
    %43 = arith.addf %37, %42 : vector<2x4x18xf32>
    %44 = vector.shape_cast %26 : vector<4x1xf32> to vector<1x4x1xf32>
    %45 = vector.broadcast %44 : vector<1x4x1xf32> to vector<2x4x18xf32>
    %46 = arith.addf %43, %45 : vector<2x4x18xf32>
    %cst_10 = arith.constant 0.000000e+00 : f32
    %47 = vector.broadcast %cst_10 : f32 to vector<2x4x18xf32>
    %48 = arith.maximumf %46, %47 : vector<2x4x18xf32>
    %c0_11 = arith.constant 0 : index
    %c0_12 = arith.constant 0 : index
    %c0_13 = arith.constant 0 : index
    %49 = vector.load %arg5[%c0_11, %c0_12, %c0_13] : memref<4x32x3xf32, #tpu.memory_space<vmem>>, vector<4x32x3xf32>
    %50 = vector.extract_strided_slice %49 {offsets = [0, 0, 0], sizes = [4, 32, 1], strides = [1, 1, 1]} : vector<4x32x3xf32> to vector<4x32x1xf32>
    %51 = vector.shape_cast %50 : vector<4x32x1xf32> to vector<1x4x32x1xf32>
    %52 = vector.extract_strided_slice %48 {offsets = [0, 0, 0], sizes = [2, 4, 16], strides = [1, 1, 1]} : vector<2x4x18xf32> to vector<2x4x16xf32>
    %53 = vector.shape_cast %52 : vector<2x4x16xf32> to vector<2x4x1x16xf32>
    %54 = vector.broadcast %51 : vector<1x4x32x1xf32> to vector<2x4x32x16xf32>
    %55 = vector.broadcast %53 : vector<2x4x1x16xf32> to vector<2x4x32x16xf32>
    %56 = arith.mulf %54, %55 : vector<2x4x32x16xf32>
    %57 = vector.extract_strided_slice %49 {offsets = [0, 0, 1], sizes = [4, 32, 1], strides = [1, 1, 1]} : vector<4x32x3xf32> to vector<4x32x1xf32>
    %58 = vector.shape_cast %57 : vector<4x32x1xf32> to vector<1x4x32x1xf32>
    %59 = vector.extract_strided_slice %48 {offsets = [0, 0, 1], sizes = [2, 4, 16], strides = [1, 1, 1]} : vector<2x4x18xf32> to vector<2x4x16xf32>
    %60 = vector.shape_cast %59 : vector<2x4x16xf32> to vector<2x4x1x16xf32>
    %61 = vector.broadcast %58 : vector<1x4x32x1xf32> to vector<2x4x32x16xf32>
    %62 = vector.broadcast %60 : vector<2x4x1x16xf32> to vector<2x4x32x16xf32>
    %63 = arith.mulf %61, %62 : vector<2x4x32x16xf32>
    %64 = arith.addf %56, %63 : vector<2x4x32x16xf32>
    %65 = vector.extract_strided_slice %49 {offsets = [0, 0, 2], sizes = [4, 32, 1], strides = [1, 1, 1]} : vector<4x32x3xf32> to vector<4x32x1xf32>
    %66 = vector.shape_cast %65 : vector<4x32x1xf32> to vector<1x4x32x1xf32>
    %67 = vector.extract_strided_slice %48 {offsets = [0, 0, 2], sizes = [2, 4, 16], strides = [1, 1, 1]} : vector<2x4x18xf32> to vector<2x4x16xf32>
    %68 = vector.shape_cast %67 : vector<2x4x16xf32> to vector<2x4x1x16xf32>
    %69 = vector.broadcast %66 : vector<1x4x32x1xf32> to vector<2x4x32x16xf32>
    %70 = vector.broadcast %68 : vector<2x4x1x16xf32> to vector<2x4x32x16xf32>
    %71 = arith.mulf %69, %70 : vector<2x4x32x16xf32>
    %72 = arith.addf %64, %71 : vector<2x4x32x16xf32>
    %c0_14 = arith.constant 0 : index
    %c0_15 = arith.constant 0 : index
    %73 = vector.load %arg6[%c0_14, %c0_15] : memref<4x32xf32, #tpu.memory_space<vmem>>, vector<4x32xf32>
    %74 = vector.shape_cast %73 : vector<4x32xf32> to vector<1x4x32x1xf32>
    %75 = vector.broadcast %74 : vector<1x4x32x1xf32> to vector<2x4x32x16xf32>
    %76 = arith.addf %72, %75 : vector<2x4x32x16xf32>
    %cst_16 = arith.constant 0.000000e+00 : f32
    %77 = vector.broadcast %cst_16 : f32 to vector<2x4x32x16xf32>
    %78 = arith.maximumf %76, %77 : vector<2x4x32x16xf32>
    %c0_17 = arith.constant 0 : index
    %c0_18 = arith.constant 0 : index
    %c0_19 = arith.constant 0 : index
    %c0_20 = arith.constant 0 : index
    %79 = vector.load %arg7[%c0_17, %c0_18, %c0_19, %c0_20] : memref<2x4x32x16xf32, #tpu.memory_space<vmem>>, vector<2x4x32x16xf32>
    tpu.vector_store %arg7[%c0_17, %c0_18, %c0_19, %c0_20], %78 {strides = array<i32>} : memref<2x4x32x16xf32, #tpu.memory_space<vmem>>, vector<2x4x32x16xf32>,
    return
  }
}

</mosaic_0001>

<llo_original>
// kernel: tpu_custom_call.1
$region0: #{tpu_custom_call.1}
  #allocation0 [shape = 'u32[]', space=smem, size = 0x4, offset = 0x4, fixed_abs, tag = 'smem constant byte address 0x4 - core index']
  #allocation1 [shape = 'u32[144,128]{1,0:T(1,128)}', space=vmem, size = 0x12000, scoped, tag = 'internal scratch']
  %s0 = inlined_call_operand.vmem [shape: f32[2,4,22], index: 0, kind: input, shape index: {}]
  %s1 = inlined_call_operand.vmem [shape: f32[4,3], index: 1, kind: input, shape index: {}]
  %s2 = inlined_call_operand.vmem [shape: f32[4,1], index: 2, kind: input, shape index: {}]
  %s3 = inlined_call_operand.vmem [shape: f32[4,3], index: 3, kind: input, shape index: {}]
  %s4 = inlined_call_operand.vmem [shape: f32[4,1], index: 4, kind: input, shape index: {}]
  %s5 = inlined_call_operand.vmem [shape: f32[4,32,3], index: 5, kind: input, shape index: {}]
  %s6 = inlined_call_operand.vmem [shape: f32[4,32], index: 6, kind: input, shape index: {}]
  %s7 = inlined_call_operand.vmem [shape: f32[2,4,32,16], index: 7, kind: output, shape index: {}]
  %s8 = sld [smem:[#allocation0]]
  $region38: #{tpu_custom_call.1} parent=0
    _
  %s10 = ssub.s32 1, %s8
  %s11 = scalar_select 0, %s10, %s8
  // Predicated region
  $region2: #{tpu_custom_call.1} parent=0 // pred_check
    _
  $region3: #{tpu_custom_call.1} parent=0 // pred_check_branch
    %13 = sbr.rel (0) target = $region5
  $region4: #{tpu_custom_call.1} parent=0 // pred_region
    _
  $region5: #{tpu_custom_call.1} parent=0 // pred_fallthru
    _
  // Predicated region
  $region6: #{tpu_custom_call.1} parent=0 // pred_check
    _
  $region7: #{tpu_custom_call.1} parent=0 // pred_check_branch
    %15 = sbr.rel (0) target = $region9
  $region8: #{tpu_custom_call.1} parent=0 // pred_region
    _
  $region9: #{tpu_custom_call.1} parent=0 // pred_fallthru
    _
  // Predicated region
  $region10: #{tpu_custom_call.1} parent=0 // pred_check
    _
  $region11: #{tpu_custom_call.1} parent=0 // pred_check_branch
    %17 = sbr.rel (0) target = $region13
  $region12: #{tpu_custom_call.1} parent=0 // pred_region
    _
  $region13: #{tpu_custom_call.1} parent=0 // pred_fallthru
    _
  // Predicated region
  $region14: #{tpu_custom_call.1} parent=0 // pred_check
    _
  $region15: #{tpu_custom_call.1} parent=0 // pred_check_branch
    %19 = sbr.rel (0) target = $region17
  $region16: #{tpu_custom_call.1} parent=0 // pred_region
    _
  $region17: #{tpu_custom_call.1} parent=0 // pred_fallthru
    _
  // Predicated region
  $region18: #{tpu_custom_call.1} parent=0 // pred_check
    _
  $region19: #{tpu_custom_call.1} parent=0 // pred_check_branch
    %21 = sbr.rel (0) target = $region21
  $region20: #{tpu_custom_call.1} parent=0 // pred_region
    _
  $region21: #{tpu_custom_call.1} parent=0 // pred_fallthru
    _
  // Predicated region
  $region22: #{tpu_custom_call.1} parent=0 // pred_check
    _
  $region23: #{tpu_custom_call.1} parent=0 // pred_check_branch
    %23 = sbr.rel (0) target = $region25
  $region24: #{tpu_custom_call.1} parent=0 // pred_region
    _
  $region25: #{tpu_custom_call.1} parent=0 // pred_fallthru
    _
  // Predicated region
  $region26: #{tpu_custom_call.1} parent=0 // pred_check
    _
  $region27: #{tpu_custom_call.1} parent=0 // pred_check_branch
    %25 = sbr.rel (0) target = $region29
  $region28: #{tpu_custom_call.1} parent=0 // pred_region
    _
  $region29: #{tpu_custom_call.1} parent=0 // pred_fallthru
    _
  %v26 = vld [vmem:[%s0] sm:$0xf]
  %v27 = vld [vmem:[%s0 + $0x4] sm:$0xf]
  %v28 = vld [vmem:[%s1] sm:$0xf]
  %v29 = vld [vmem:[%s2] sm:$0xf]
  %31 = vset.pattern.permute.xlu0 0
  %32 = vperm.xlu0 %31, %v28
  %v33 = vpop.permute.xlu0 %32
  %v35 = vmul.f32 %v33, %v26
  %v36 = vmul.f32 %v33, %v27
  %37 = vset.pattern.permute.xlu0 1
  %38 = vperm.xlu0 %37, %v28
  %v39 = vpop.permute.xlu0 %38
  %v41 = vmul.f32 %v39, %v26
  %v42 = vmul.f32 %v39, %v27
  %45 = vrot.lane.b32.xlu0 %v41, 127
  %v46 = vpop.permute.xlu0 %45
  %47 = vrot.lane.b32.xlu0 %v42, 127
  %v48 = vpop.permute.xlu0 %47
  %v51 = vadd.f32 %v35, %v46
  %v52 = vadd.f32 %v36, %v48
  %53 = vset.pattern.permute.xlu0 2
  %54 = vperm.xlu0 %53, %v28
  %v55 = vpop.permute.xlu0 %54
  %v57 = vmul.f32 %v55, %v26
  %v58 = vmul.f32 %v55, %v27
  %61 = vrot.lane.b32.xlu0 %v57, 126
  %v62 = vpop.permute.xlu0 %61
  %63 = vrot.lane.b32.xlu0 %v58, 126
  %v64 = vpop.permute.xlu0 %63
  %v67 = vadd.f32 %v51, %v62
  %v68 = vadd.f32 %v52, %v64
  %70 = vset.pattern.permute.xlu0 0
  %71 = vperm.xlu0 %70, %v29
  %v72 = vpop.permute.xlu0 %71
  %v74 = vadd.f32 %v67, %v72
  %v75 = vadd.f32 %v68, %v72
  %v76 = vmax.f32 %v74, 0.0
  %v77 = vmax.f32 %v75, 0.0
  %v78 = vld [vmem:[%s3] sm:$0xf]
  %v79 = vld [vmem:[%s4] sm:$0xf]
  %81 = vset.pattern.permute.xlu0 0
  %82 = vperm.xlu0 %81, %v78
  %v83 = vpop.permute.xlu0 %82
  %v85 = vmul.f32 %v83, %v76
  %v86 = vmul.f32 %v83, %v77
  %87 = vset.pattern.permute.xlu0 1
  %88 = vperm.xlu0 %87, %v78
  %v89 = vpop.permute.xlu0 %88
  %v91 = vmul.f32 %v89, %v76
  %v92 = vmul.f32 %v89, %v77
  %95 = vrot.lane.b32.xlu0 %v91, 127
  %v96 = vpop.permute.xlu0 %95
  %97 = vrot.lane.b32.xlu0 %v92, 127
  %v98 = vpop.permute.xlu0 %97
  %v101 = vadd.f32 %v85, %v96
  %v102 = vadd.f32 %v86, %v98
  %103 = vset.pattern.permute.xlu0 2
  %104 = vperm.xlu0 %103, %v78
  %v105 = vpop.permute.xlu0 %104
  %v107 = vmul.f32 %v105, %v76
  %v108 = vmul.f32 %v105, %v77
  %111 = vrot.lane.b32.xlu0 %v107, 126
  %v112 = vpop.permute.xlu0 %111
  %113 = vrot.lane.b32.xlu0 %v108, 126
  %v114 = vpop.permute.xlu0 %113
  %v117 = vadd.f32 %v101, %v112
  %v118 = vadd.f32 %v102, %v114
  %120 = vset.pattern.permute.xlu0 0
  %121 = vperm.xlu0 %120, %v79
  %v122 = vpop.permute.xlu0 %121
  %v124 = vadd.f32 %v117, %v122
  %v125 = vadd.f32 %v118, %v122
  %v126 = vmax.f32 %v124, 0.0
  %v127 = vmax.f32 %v125, 0.0
  %v128 = vld [vmem:[%s5] sm:$0xff]
  %v129 = vld [vmem:[%s5 + $0x8] sm:$0xff]
  %v130 = vld [vmem:[%s5 + $0x10] sm:$0xff]
  %v131 = vld [vmem:[%s5 + $0x18] sm:$0xff]
  %v132 = vld [vmem:[%s5 + $0x20] sm:$0xff]
  %v133 = vld [vmem:[%s5 + $0x28] sm:$0xff]
  %v134 = vld [vmem:[%s5 + $0x30] sm:$0xff]
  %v135 = vld [vmem:[%s5 + $0x38] sm:$0xff]
  %v136 = vld [vmem:[%s5 + $0x40] sm:$0xff]
  %v137 = vld [vmem:[%s5 + $0x48] sm:$0xff]
  %v138 = vld [vmem:[%s5 + $0x50] sm:$0xff]
  %v139 = vld [vmem:[%s5 + $0x58] sm:$0xff]
  %v140 = vld [vmem:[%s5 + $0x60] sm:$0xff]
  %v141 = vld [vmem:[%s5 + $0x68] sm:$0xff]
  %v142 = vld [vmem:[%s5 + $0x70] sm:$0xff]
  %v143 = vld [vmem:[%s5 + $0x78] sm:$0xff]
  %v147 = vunpack.c.l.s4 1966171168
  %v148 = vunpack.c.0.s8 %v147
  %v149 = vlaneseq
  %v150 = vshrl.u32 %v149, 7
  %v151 = vsub.s32 %v148, %v150
  %v152 = vrot.slane %v126, %v151
  %v153 = vcombine.high %v152, %v152
  %v155 = vunpack.c.l.s4 1966171168
  %v156 = vunpack.c.0.s8 %v155
  %v157 = vlaneseq
  %v158 = vshrl.u32 %v157, 7
  %v159 = vsub.s32 %v156, %v158
  %v160 = vrot.slane %v152, %v159
  %v162 = vunpack.c.l.s4 1966171168
  %v163 = vunpack.c.0.s8 %v162
  %v164 = vlaneseq
  %v165 = vshrl.u32 %v164, 7
  %v166 = vsub.s32 %v163, %v165
  %v167 = vrot.slane %v153, %v166
  %v168 = vcombine.high %v160, %v160
  %v169 = vcombine.high %v167, %v167
  %v171 = vunpack.c.l.s4 1966171168
  %v172 = vunpack.c.0.s8 %v171
  %v173 = vlaneseq
  %v174 = vshrl.u32 %v173, 7
  %v175 = vsub.s32 %v172, %v174
  %v176 = vrot.slane %v127, %v175
  %v177 = vcombine.high %v176, %v176
  %v179 = vunpack.c.l.s4 1966171168
  %v180 = vunpack.c.0.s8 %v179
  %v181 = vlaneseq
  %v182 = vshrl.u32 %v181, 7
  %v183 = vsub.s32 %v180, %v182
  %v184 = vrot.slane %v176, %v183
  %v186 = vunpack.c.l.s4 1966171168
  %v187 = vunpack.c.0.s8 %v186
  %v188 = vlaneseq
  %v189 = vshrl.u32 %v188, 7
  %v190 = vsub.s32 %v187, %v189
  %v191 = vrot.slane %v177, %v190
  %v192 = vcombine.high %v184, %v184
  %v193 = vcombine.high %v191, %v191
  %195 = vset.pattern.permute.xlu0 0
  %196 = vperm.xlu0 %195, %v128
  %v197 = vpop.permute.xlu0 %196
  %200 = vset.pattern.permute.xlu0 0
  %201 = vperm.xlu0 %200, %v129
  %v202 = vpop.permute.xlu0 %201
  %205 = vset.pattern.permute.xlu0 0
  %206 = vperm.xlu0 %205, %v130
  %v207 = vpop.permute.xlu0 %206
  %210 = vset.pattern.permute.xlu0 0
  %211 = vperm.xlu0 %210, %v131
  %v212 = vpop.permute.xlu0 %211
  %215 = vset.pattern.permute.xlu0 0
  %216 = vperm.xlu0 %215, %v132
  %v217 = vpop.permute.xlu0 %216
  %220 = vset.pattern.permute.xlu0 0
  %221 = vperm.xlu0 %220, %v133
  %v222 = vpop.permute.xlu0 %221
  %225 = vset.pattern.permute.xlu0 0
  %226 = vperm.xlu0 %225, %v134
  %v227 = vpop.permute.xlu0 %226
  %230 = vset.pattern.permute.xlu0 0
  %231 = vperm.xlu0 %230, %v135
  %v232 = vpop.permute.xlu0 %231
  %235 = vset.pattern.permute.xlu0 0
  %236 = vperm.xlu0 %235, %v136
  %v237 = vpop.permute.xlu0 %236
  %240 = vset.pattern.permute.xlu0 0
  %241 = vperm.xlu0 %240, %v137
  %v242 = vpop.permute.xlu0 %241
  %245 = vset.pattern.permute.xlu0 0
  %246 = vperm.xlu0 %245, %v138
  %v247 = vpop.permute.xlu0 %246
  %250 = vset.pattern.permute.xlu0 0
  %251 = vperm.xlu0 %250, %v139
  %v252 = vpop.permute.xlu0 %251
  %255 = vset.pattern.permute.xlu0 0
  %256 = vperm.xlu0 %255, %v140
  %v257 = vpop.permute.xlu0 %256
  %260 = vset.pattern.permute.xlu0 0
  %261 = vperm.xlu0 %260, %v141
  %v262 = vpop.permute.xlu0 %261
  %265 = vset.pattern.permute.xlu0 0
  %266 = vperm.xlu0 %265, %v142
  %v267 = vpop.permute.xlu0 %266
  %270 = vset.pattern.permute.xlu0 0
  %271 = vperm.xlu0 %270, %v143
  %v272 = vpop.permute.xlu0 %271
  %v274 = vlaneseq
  %v275 = vshrl.u32 %v274, 7
  %v276 = vsub.s32 0, %v275
  %v277 = vrot.slane %v160, %v276
  %v278 = vlaneseq
  %v279 = vshrl.u32 %v278, 7
  %v280 = vsub.s32 0, %v279
  %v281 = vrot.slane %v167, %v280
  %v282 = vlaneseq
  %v283 = vshrl.u32 %v282, 7
  %v284 = vsub.s32 0, %v283
  %v285 = vrot.slane %v168, %v284
  %v286 = vlaneseq
  %v287 = vshrl.u32 %v286, 7
  %v288 = vsub.s32 0, %v287
  %v289 = vrot.slane %v169, %v288
  %v290 = vlaneseq
  %v291 = vshrl.u32 %v290, 7
  %v292 = vsub.s32 0, %v291
  %v293 = vrot.slane %v184, %v292
  %v294 = vlaneseq
  %v295 = vshrl.u32 %v294, 7
  %v296 = vsub.s32 0, %v295
  %v297 = vrot.slane %v191, %v296
  %v298 = vlaneseq
  %v299 = vshrl.u32 %v298, 7
  %v300 = vsub.s32 0, %v299
  %v301 = vrot.slane %v192, %v300
  %v302 = vlaneseq
  %v303 = vshrl.u32 %v302, 7
  %v304 = vsub.s32 0, %v303
  %v305 = vrot.slane %v193, %v304
  %v314 = vmul.f32 %v197, %v277
  %v315 = vmul.f32 %v202, %v277
  %v316 = vmul.f32 %v207, %v277
  %v317 = vmul.f32 %v212, %v277
  %v318 = vmul.f32 %v217, %v281
  %v319 = vmul.f32 %v222, %v281
  %v320 = vmul.f32 %v227, %v281
  %v321 = vmul.f32 %v232, %v281
  %v322 = vmul.f32 %v237, %v285
  %v323 = vmul.f32 %v242, %v285
  %v324 = vmul.f32 %v247, %v285
  %v325 = vmul.f32 %v252, %v285
  %v326 = vmul.f32 %v257, %v289
  %v327 = vmul.f32 %v262, %v289
  %v328 = vmul.f32 %v267, %v289
  %v329 = vmul.f32 %v272, %v289
  %v330 = vmul.f32 %v197, %v293
  %v331 = vmul.f32 %v202, %v293
  %v332 = vmul.f32 %v207, %v293
  %v333 = vmul.f32 %v212, %v293
  %v334 = vmul.f32 %v217, %v297
  %v335 = vmul.f32 %v222, %v297
  %v336 = vmul.f32 %v227, %v297
  %v337 = vmul.f32 %v232, %v297
  %v338 = vmul.f32 %v237, %v301
  %v339 = vmul.f32 %v242, %v301
  %v340 = vmul.f32 %v247, %v301
  %v341 = vmul.f32 %v252, %v301
  %v342 = vmul.f32 %v257, %v305
  %v343 = vmul.f32 %v262, %v305
  %v344 = vmul.f32 %v267, %v305
  %v345 = vmul.f32 %v272, %v305
  %346 = vset.pattern.permute.xlu0 1
  %347 = vperm.xlu0 %346, %v128
  %v348 = vpop.permute.xlu0 %347
  %350 = vset.pattern.permute.xlu0 1
  %351 = vperm.xlu0 %350, %v129
  %v352 = vpop.permute.xlu0 %351
  %354 = vset.pattern.permute.xlu0 1
  %355 = vperm.xlu0 %354, %v130
  %v356 = vpop.permute.xlu0 %355
  %358 = vset.pattern.permute.xlu0 1
  %359 = vperm.xlu0 %358, %v131
  %v360 = vpop.permute.xlu0 %359
  %362 = vset.pattern.permute.xlu0 1
  %363 = vperm.xlu0 %362, %v132
  %v364 = vpop.permute.xlu0 %363
  %366 = vset.pattern.permute.xlu0 1
  %367 = vperm.xlu0 %366, %v133
  %v368 = vpop.permute.xlu0 %367
  %370 = vset.pattern.permute.xlu0 1
  %371 = vperm.xlu0 %370, %v134
  %v372 = vpop.permute.xlu0 %371
  %374 = vset.pattern.permute.xlu0 1
  %375 = vperm.xlu0 %374, %v135
  %v376 = vpop.permute.xlu0 %375
  %378 = vset.pattern.permute.xlu0 1
  %379 = vperm.xlu0 %378, %v136
  %v380 = vpop.permute.xlu0 %379
  %382 = vset.pattern.permute.xlu0 1
  %383 = vperm.xlu0 %382, %v137
  %v384 = vpop.permute.xlu0 %383
  %386 = vset.pattern.permute.xlu0 1
  %387 = vperm.xlu0 %386, %v138
  %v388 = vpop.permute.xlu0 %387
  %390 = vset.pattern.permute.xlu0 1
  %391 = vperm.xlu0 %390, %v139
  %v392 = vpop.permute.xlu0 %391
  %394 = vset.pattern.permute.xlu0 1
  %395 = vperm.xlu0 %394, %v140
  %v396 = vpop.permute.xlu0 %395
  %398 = vset.pattern.permute.xlu0 1
  %399 = vperm.xlu0 %398, %v141
  %v400 = vpop.permute.xlu0 %399
  %402 = vset.pattern.permute.xlu0 1
  %403 = vperm.xlu0 %402, %v142
  %v404 = vpop.permute.xlu0 %403
  %406 = vset.pattern.permute.xlu0 1
  %407 = vperm.xlu0 %406, %v143
  %v408 = vpop.permute.xlu0 %407
  %v410 = vmul.f32 %v348, %v277
  %v411 = vmul.f32 %v352, %v277
  %v412 = vmul.f32 %v356, %v277
  %v413 = vmul.f32 %v360, %v277
  %v414 = vmul.f32 %v364, %v281
  %v415 = vmul.f32 %v368, %v281
  %v416 = vmul.f32 %v372, %v281
  %v417 = vmul.f32 %v376, %v281
  %v418 = vmul.f32 %v380, %v285
  %v419 = vmul.f32 %v384, %v285
  %v420 = vmul.f32 %v388, %v285
  %v421 = vmul.f32 %v392, %v285
  %v422 = vmul.f32 %v396, %v289
  %v423 = vmul.f32 %v400, %v289
  %v424 = vmul.f32 %v404, %v289
  %v425 = vmul.f32 %v408, %v289
  %v426 = vmul.f32 %v348, %v293
  %v427 = vmul.f32 %v352, %v293
  %v428 = vmul.f32 %v356, %v293
  %v429 = vmul.f32 %v360, %v293
  %v430 = vmul.f32 %v364, %v297
  %v431 = vmul.f32 %v368, %v297
  %v432 = vmul.f32 %v372, %v297
  %v433 = vmul.f32 %v376, %v297
  %v434 = vmul.f32 %v380, %v301
  %v435 = vmul.f32 %v384, %v301
  %v436 = vmul.f32 %v388, %v301
  %v437 = vmul.f32 %v392, %v301
  %v438 = vmul.f32 %v396, %v305
  %v439 = vmul.f32 %v400, %v305
  %v440 = vmul.f32 %v404, %v305
  %v441 = vmul.f32 %v408, %v305
  %474 = vrot.lane.b32.xlu0 %v410, 127
  %v475 = vpop.permute.xlu0 %474
  %476 = vrot.lane.b32.xlu0 %v411, 127
  %v477 = vpop.permute.xlu0 %476
  %478 = vrot.lane.b32.xlu0 %v412, 127
  %v479 = vpop.permute.xlu0 %478
  %480 = vrot.lane.b32.xlu0 %v413, 127
  %v481 = vpop.permute.xlu0 %480
  %482 = vrot.lane.b32.xlu0 %v414, 127
  %v483 = vpop.permute.xlu0 %482
  %484 = vrot.lane.b32.xlu0 %v415, 127
  %v485 = vpop.permute.xlu0 %484
  %486 = vrot.lane.b32.xlu0 %v416, 127
  %v487 = vpop.permute.xlu0 %486
  %488 = vrot.lane.b32.xlu0 %v417, 127
  %v489 = vpop.permute.xlu0 %488
  %490 = vrot.lane.b32.xlu0 %v418, 127
  %v491 = vpop.permute.xlu0 %490
  %492 = vrot.lane.b32.xlu0 %v419, 127
  %v493 = vpop.permute.xlu0 %492
  %494 = vrot.lane.b32.xlu0 %v420, 127
  %v495 = vpop.permute.xlu0 %494
  %496 = vrot.lane.b32.xlu0 %v421, 127
  %v497 = vpop.permute.xlu0 %496
  %498 = vrot.lane.b32.xlu0 %v422, 127
  %v499 = vpop.permute.xlu0 %498
  %500 = vrot.lane.b32.xlu0 %v423, 127
  %v501 = vpop.permute.xlu0 %500
  %502 = vrot.lane.b32.xlu0 %v424, 127
  %v503 = vpop.permute.xlu0 %502
  %504 = vrot.lane.b32.xlu0 %v425, 127
  %v505 = vpop.permute.xlu0 %504
  %506 = vrot.lane.b32.xlu0 %v426, 127
  %v507 = vpop.permute.xlu0 %506
  %508 = vrot.lane.b32.xlu0 %v427, 127
  %v509 = vpop.permute.xlu0 %508
  %510 = vrot.lane.b32.xlu0 %v428, 127
  %v511 = vpop.permute.xlu0 %510
  %512 = vrot.lane.b32.xlu0 %v429, 127
  %v513 = vpop.permute.xlu0 %512
  %514 = vrot.lane.b32.xlu0 %v430, 127
  %v515 = vpop.permute.xlu0 %514
  %516 = vrot.lane.b32.xlu0 %v431, 127
  %v517 = vpop.permute.xlu0 %516
  %518 = vrot.lane.b32.xlu0 %v432, 127
  %v519 = vpop.permute.xlu0 %518
  %520 = vrot.lane.b32.xlu0 %v433, 127
  %v521 = vpop.permute.xlu0 %520
  %522 = vrot.lane.b32.xlu0 %v434, 127
  %v523 = vpop.permute.xlu0 %522
  %524 = vrot.lane.b32.xlu0 %v435, 127
  %v525 = vpop.permute.xlu0 %524
  %526 = vrot.lane.b32.xlu0 %v436, 127
  %v527 = vpop.permute.xlu0 %526
  %528 = vrot.lane.b32.xlu0 %v437, 127
  %v529 = vpop.permute.xlu0 %528
  %530 = vrot.lane.b32.xlu0 %v438, 127
  %v531 = vpop.permute.xlu0 %530
  %532 = vrot.lane.b32.xlu0 %v439, 127
  %v533 = vpop.permute.xlu0 %532
  %534 = vrot.lane.b32.xlu0 %v440, 127
  %v535 = vpop.permute.xlu0 %534
  %536 = vrot.lane.b32.xlu0 %v441, 127
  %v537 = vpop.permute.xlu0 %536
  %v570 = vadd.f32 %v314, %v475
  %v571 = vadd.f32 %v315, %v477
  %v572 = vadd.f32 %v316, %v479
  %v573 = vadd.f32 %v317, %v481
  %v574 = vadd.f32 %v318, %v483
  %v575 = vadd.f32 %v319, %v485
  %v576 = vadd.f32 %v320, %v487
  %v577 = vadd.f32 %v321, %v489
  %v578 = vadd.f32 %v322, %v491
  %v579 = vadd.f32 %v323, %v493
  %v580 = vadd.f32 %v324, %v495
  %v581 = vadd.f32 %v325, %v497
  %v582 = vadd.f32 %v326, %v499
  %v583 = vadd.f32 %v327, %v501
  %v584 = vadd.f32 %v328, %v503
  %v585 = vadd.f32 %v329, %v505
  %v586 = vadd.f32 %v330, %v507
  %v587 = vadd.f32 %v331, %v509
  %v588 = vadd.f32 %v332, %v511
  %v589 = vadd.f32 %v333, %v513
  %v590 = vadd.f32 %v334, %v515
  %v591 = vadd.f32 %v335, %v517
  %v592 = vadd.f32 %v336, %v519
  %v593 = vadd.f32 %v337, %v521
  %v594 = vadd.f32 %v338, %v523
  %v595 = vadd.f32 %v339, %v525
  %v596 = vadd.f32 %v340, %v527
  %v597 = vadd.f32 %v341, %v529
  %v598 = vadd.f32 %v342, %v531
  %v599 = vadd.f32 %v343, %v533
  %v600 = vadd.f32 %v344, %v535
  %v601 = vadd.f32 %v345, %v537
  %602 = vset.pattern.permute.xlu0 2
  %603 = vperm.xlu0 %602, %v128
  %v604 = vpop.permute.xlu0 %603
  %606 = vset.pattern.permute.xlu0 2
  %607 = vperm.xlu0 %606, %v129
  %v608 = vpop.permute.xlu0 %607
  %610 = vset.pattern.permute.xlu0 2
  %611 = vperm.xlu0 %610, %v130
  %v612 = vpop.permute.xlu0 %611
  %614 = vset.pattern.permute.xlu0 2
  %615 = vperm.xlu0 %614, %v131
  %v616 = vpop.permute.xlu0 %615
  %618 = vset.pattern.permute.xlu0 2
  %619 = vperm.xlu0 %618, %v132
  %v620 = vpop.permute.xlu0 %619
  %622 = vset.pattern.permute.xlu0 2
  %623 = vperm.xlu0 %622, %v133
  %v624 = vpop.permute.xlu0 %623
  %626 = vset.pattern.permute.xlu0 2
  %627 = vperm.xlu0 %626, %v134
  %v628 = vpop.permute.xlu0 %627
  %630 = vset.pattern.permute.xlu0 2
  %631 = vperm.xlu0 %630, %v135
  %v632 = vpop.permute.xlu0 %631
  %634 = vset.pattern.permute.xlu0 2
  %635 = vperm.xlu0 %634, %v136
  %v636 = vpop.permute.xlu0 %635
  %638 = vset.pattern.permute.xlu0 2
  %639 = vperm.xlu0 %638, %v137
  %v640 = vpop.permute.xlu0 %639
  %642 = vset.pattern.permute.xlu0 2
  %643 = vperm.xlu0 %642, %v138
  %v644 = vpop.permute.xlu0 %643
  %646 = vset.pattern.permute.xlu0 2
  %647 = vperm.xlu0 %646, %v139
  %v648 = vpop.permute.xlu0 %647
  %650 = vset.pattern.permute.xlu0 2
  %651 = vperm.xlu0 %650, %v140
  %v652 = vpop.permute.xlu0 %651
  %654 = vset.pattern.permute.xlu0 2
  %655 = vperm.xlu0 %654, %v141
  %v656 = vpop.permute.xlu0 %655
  %658 = vset.pattern.permute.xlu0 2
  %659 = vperm.xlu0 %658, %v142
  %v660 = vpop.permute.xlu0 %659
  %662 = vset.pattern.permute.xlu0 2
  %663 = vperm.xlu0 %662, %v143
  %v664 = vpop.permute.xlu0 %663
  %v666 = vmul.f32 %v604, %v277
  %v667 = vmul.f32 %v608, %v277
  %v668 = vmul.f32 %v612, %v277
  %v669 = vmul.f32 %v616, %v277
  %v670 = vmul.f32 %v620, %v281
  %v671 = vmul.f32 %v624, %v281
  %v672 = vmul.f32 %v628, %v281
  %v673 = vmul.f32 %v632, %v281
  %v674 = vmul.f32 %v636, %v285
  %v675 = vmul.f32 %v640, %v285
  %v676 = vmul.f32 %v644, %v285
  %v677 = vmul.f32 %v648, %v285
  %v678 = vmul.f32 %v652, %v289
  %v679 = vmul.f32 %v656, %v289
  %v680 = vmul.f32 %v660, %v289
  %v681 = vmul.f32 %v664, %v289
  %v682 = vmul.f32 %v604, %v293
  %v683 = vmul.f32 %v608, %v293
  %v684 = vmul.f32 %v612, %v293
  %v685 = vmul.f32 %v616, %v293
  %v686 = vmul.f32 %v620, %v297
  %v687 = vmul.f32 %v624, %v297
  %v688 = vmul.f32 %v628, %v297
  %v689 = vmul.f32 %v632, %v297
  %v690 = vmul.f32 %v636, %v301
  %v691 = vmul.f32 %v640, %v301
  %v692 = vmul.f32 %v644, %v301
  %v693 = vmul.f32 %v648, %v301
  %v694 = vmul.f32 %v652, %v305
  %v695 = vmul.f32 %v656, %v305
  %v696 = vmul.f32 %v660, %v305
  %v697 = vmul.f32 %v664, %v305
  %730 = vrot.lane.b32.xlu0 %v666, 126
  %v731 = vpop.permute.xlu0 %730
  %732 = vrot.lane.b32.xlu0 %v667, 126
  %v733 = vpop.permute.xlu0 %732
  %734 = vrot.lane.b32.xlu0 %v668, 126
  %v735 = vpop.permute.xlu0 %734
  %736 = vrot.lane.b32.xlu0 %v669, 126
  %v737 = vpop.permute.xlu0 %736
  %738 = vrot.lane.b32.xlu0 %v670, 126
  %v739 = vpop.permute.xlu0 %738
  %740 = vrot.lane.b32.xlu0 %v671, 126
  %v741 = vpop.permute.xlu0 %740
  %742 = vrot.lane.b32.xlu0 %v672, 126
  %v743 = vpop.permute.xlu0 %742
  %744 = vrot.lane.b32.xlu0 %v673, 126
  %v745 = vpop.permute.xlu0 %744
  %746 = vrot.lane.b32.xlu0 %v674, 126
  %v747 = vpop.permute.xlu0 %746
  %748 = vrot.lane.b32.xlu0 %v675, 126
  %v749 = vpop.permute.xlu0 %748
  %750 = vrot.lane.b32.xlu0 %v676, 126
  %v751 = vpop.permute.xlu0 %750
  %752 = vrot.lane.b32.xlu0 %v677, 126
  %v753 = vpop.permute.xlu0 %752
  %754 = vrot.lane.b32.xlu0 %v678, 126
  %v755 = vpop.permute.xlu0 %754
  %756 = vrot.lane.b32.xlu0 %v679, 126
  %v757 = vpop.permute.xlu0 %756
  %758 = vrot.lane.b32.xlu0 %v680, 126
  %v759 = vpop.permute.xlu0 %758
  %760 = vrot.lane.b32.xlu0 %v681, 126
  %v761 = vpop.permute.xlu0 %760
  %762 = vrot.lane.b32.xlu0 %v682, 126
  %v763 = vpop.permute.xlu0 %762
  %764 = vrot.lane.b32.xlu0 %v683, 126
  %v765 = vpop.permute.xlu0 %764
  %766 = vrot.lane.b32.xlu0 %v684, 126
  %v767 = vpop.permute.xlu0 %766
  %768 = vrot.lane.b32.xlu0 %v685, 126
  %v769 = vpop.permute.xlu0 %768
  %770 = vrot.lane.b32.xlu0 %v686, 126
  %v771 = vpop.permute.xlu0 %770
  %772 = vrot.lane.b32.xlu0 %v687, 126
  %v773 = vpop.permute.xlu0 %772
  %774 = vrot.lane.b32.xlu0 %v688, 126
  %v775 = vpop.permute.xlu0 %774
  %776 = vrot.lane.b32.xlu0 %v689, 126
  %v777 = vpop.permute.xlu0 %776
  %778 = vrot.lane.b32.xlu0 %v690, 126
  %v779 = vpop.permute.xlu0 %778
  %780 = vrot.lane.b32.xlu0 %v691, 126
  %v781 = vpop.permute.xlu0 %780
  %782 = vrot.lane.b32.xlu0 %v692, 126
  %v783 = vpop.permute.xlu0 %782
  %784 = vrot.lane.b32.xlu0 %v693, 126
  %v785 = vpop.permute.xlu0 %784
  %786 = vrot.lane.b32.xlu0 %v694, 126
  %v787 = vpop.permute.xlu0 %786
  %788 = vrot.lane.b32.xlu0 %v695, 126
  %v789 = vpop.permute.xlu0 %788
  %790 = vrot.lane.b32.xlu0 %v696, 126
  %v791 = vpop.permute.xlu0 %790
  %792 = vrot.lane.b32.xlu0 %v697, 126
  %v793 = vpop.permute.xlu0 %792
  %v826 = vadd.f32 %v570, %v731
  %v827 = vadd.f32 %v571, %v733
  %v828 = vadd.f32 %v572, %v735
  %v829 = vadd.f32 %v573, %v737
  %v830 = vadd.f32 %v574, %v739
  %v831 = vadd.f32 %v575, %v741
  %v832 = vadd.f32 %v576, %v743
  %v833 = vadd.f32 %v577, %v745
  %v834 = vadd.f32 %v578, %v747
  %v835 = vadd.f32 %v579, %v749
  %v836 = vadd.f32 %v580, %v751
  %v837 = vadd.f32 %v581, %v753
  %v838 = vadd.f32 %v582, %v755
  %v839 = vadd.f32 %v583, %v757
  %v840 = vadd.f32 %v584, %v759
  %v841 = vadd.f32 %v585, %v761
  %v842 = vadd.f32 %v586, %v763
  %v843 = vadd.f32 %v587, %v765
  %v844 = vadd.f32 %v588, %v767
  %v845 = vadd.f32 %v589, %v769
  %v846 = vadd.f32 %v590, %v771
  %v847 = vadd.f32 %v591, %v773
  %v848 = vadd.f32 %v592, %v775
  %v849 = vadd.f32 %v593, %v777
  %v850 = vadd.f32 %v594, %v779
  %v851 = vadd.f32 %v595, %v781
  %v852 = vadd.f32 %v596, %v783
  %v853 = vadd.f32 %v597, %v785
  %v854 = vadd.f32 %v598, %v787
  %v855 = vadd.f32 %v599, %v789
  %v856 = vadd.f32 %v600, %v791
  %v857 = vadd.f32 %v601, %v793
  %v858 = vld [vmem:[%s6] sm:$0xf]
  %v859 = vlaneseq
  %v860 = vshrl.u32 %v859, 7
  %v861 = vsub.s32 0, %v860
  %v862 = vrot.slane %v858, %v861
  %864 = vbcast.lane.b32.xlu0 %v862, 256
  %v865 = vpop.permute.xlu0 %864
  %s867 = sor.u32 256, 8
  %868 = vbcast.lane.b32.xlu0 %v862, %s867
  %v869 = vpop.permute.xlu0 %868
  %s871 = sor.u32 256, 16
  %872 = vbcast.lane.b32.xlu0 %v862, %s871
  %v873 = vpop.permute.xlu0 %872
  %s875 = sor.u32 256, 24
  %876 = vbcast.lane.b32.xlu0 %v862, %s875
  %v877 = vpop.permute.xlu0 %876
  %v878 = vlaneseq
  %v879 = vshrl.u32 %v878, 7
  %v880 = vsub.s32 1, %v879
  %v881 = vrot.slane %v858, %v880
  %883 = vbcast.lane.b32.xlu0 %v881, 256
  %v884 = vpop.permute.xlu0 %883
  %s886 = sor.u32 256, 8
  %887 = vbcast.lane.b32.xlu0 %v881, %s886
  %v888 = vpop.permute.xlu0 %887
  %s890 = sor.u32 256, 16
  %891 = vbcast.lane.b32.xlu0 %v881, %s890
  %v892 = vpop.permute.xlu0 %891
  %s894 = sor.u32 256, 24
  %895 = vbcast.lane.b32.xlu0 %v881, %s894
  %v896 = vpop.permute.xlu0 %895
  %v897 = vlaneseq
  %v898 = vshrl.u32 %v897, 7
  %v899 = vsub.s32 2, %v898
  %v900 = vrot.slane %v858, %v899
  %902 = vbcast.lane.b32.xlu0 %v900, 256
  %v903 = vpop.permute.xlu0 %902
  %s905 = sor.u32 256, 8
  %906 = vbcast.lane.b32.xlu0 %v900, %s905
  %v907 = vpop.permute.xlu0 %906
  %s909 = sor.u32 256, 16
  %910 = vbcast.lane.b32.xlu0 %v900, %s909
  %v911 = vpop.permute.xlu0 %910
  %s913 = sor.u32 256, 24
  %914 = vbcast.lane.b32.xlu0 %v900, %s913
  %v915 = vpop.permute.xlu0 %914
  %v916 = vlaneseq
  %v917 = vshrl.u32 %v916, 7
  %v918 = vsub.s32 3, %v917
  %v919 = vrot.slane %v858, %v918
  %921 = vbcast.lane.b32.xlu0 %v919, 256
  %v922 = vpop.permute.xlu0 %921
  %s924 = sor.u32 256, 8
  %925 = vbcast.lane.b32.xlu0 %v919, %s924
  %v926 = vpop.permute.xlu0 %925
  %s928 = sor.u32 256, 16
  %929 = vbcast.lane.b32.xlu0 %v919, %s928
  %v930 = vpop.permute.xlu0 %929
  %s932 = sor.u32 256, 24
  %933 = vbcast.lane.b32.xlu0 %v919, %s932
  %v934 = vpop.permute.xlu0 %933
  %v935 = vadd.f32 %v826, %v865
  %v936 = vadd.f32 %v827, %v869
  %v937 = vadd.f32 %v828, %v873
  %v938 = vadd.f32 %v829, %v877
  %v939 = vadd.f32 %v830, %v884
  %v940 = vadd.f32 %v831, %v888
  %v941 = vadd.f32 %v832, %v892
  %v942 = vadd.f32 %v833, %v896
  %v943 = vadd.f32 %v834, %v903
  %v944 = vadd.f32 %v835, %v907
  %v945 = vadd.f32 %v836, %v911
  %v946 = vadd.f32 %v837, %v915
  %v947 = vadd.f32 %v838, %v922
  %v948 = vadd.f32 %v839, %v926
  %v949 = vadd.f32 %v840, %v930
  %v950 = vadd.f32 %v841, %v934
  %v951 = vadd.f32 %v842, %v865
  %v952 = vadd.f32 %v843, %v869
  %v953 = vadd.f32 %v844, %v873
  %v954 = vadd.f32 %v845, %v877
  %v955 = vadd.f32 %v846, %v884
  %v956 = vadd.f32 %v847, %v888
  %v957 = vadd.f32 %v848, %v892
  %v958 = vadd.f32 %v849, %v896
  %v959 = vadd.f32 %v850, %v903
  %v960 = vadd.f32 %v851, %v907
  %v961 = vadd.f32 %v852, %v911
  %v962 = vadd.f32 %v853, %v915
  %v963 = vadd.f32 %v854, %v922
  %v964 = vadd.f32 %v855, %v926
  %v965 = vadd.f32 %v856, %v930
  %v966 = vadd.f32 %v857, %v934
  %v967 = vmax.f32 %v935, 0.0
  %v968 = vmax.f32 %v936, 0.0
  %v969 = vmax.f32 %v937, 0.0
  %v970 = vmax.f32 %v938, 0.0
  %v971 = vmax.f32 %v939, 0.0
  %v972 = vmax.f32 %v940, 0.0
  %v973 = vmax.f32 %v941, 0.0
  %v974 = vmax.f32 %v942, 0.0
  %v975 = vmax.f32 %v943, 0.0
  %v976 = vmax.f32 %v944, 0.0
  %v977 = vmax.f32 %v945, 0.0
  %v978 = vmax.f32 %v946, 0.0
  %v979 = vmax.f32 %v947, 0.0
  %v980 = vmax.f32 %v948, 0.0
  %v981 = vmax.f32 %v949, 0.0
  %v982 = vmax.f32 %v950, 0.0
  %v983 = vmax.f32 %v951, 0.0
  %v984 = vmax.f32 %v952, 0.0
  %v985 = vmax.f32 %v953, 0.0
  %v986 = vmax.f32 %v954, 0.0
  %v987 = vmax.f32 %v955, 0.0
  %v988 = vmax.f32 %v956, 0.0
  %v989 = vmax.f32 %v957, 0.0
  %v990 = vmax.f32 %v958, 0.0
  %v991 = vmax.f32 %v959, 0.0
  %v992 = vmax.f32 %v960, 0.0
  %v993 = vmax.f32 %v961, 0.0
  %v994 = vmax.f32 %v962, 0.0
  %v995 = vmax.f32 %v963, 0.0
  %v996 = vmax.f32 %v964, 0.0
  %v997 = vmax.f32 %v965, 0.0
  %v998 = vmax.f32 %v966, 0.0
  %vm999 = vcmask 130048
  %1000 = vst.msk [vmem:[%s7] sm:$0xff] %vm999, %v967
  %1001 = vst.msk [vmem:[%s7 + $0x8] sm:$0xff] %vm999, %v968
  %1002 = vst.msk [vmem:[%s7 + $0x10] sm:$0xff] %vm999, %v969
  %1003 = vst.msk [vmem:[%s7 + $0x18] sm:$0xff] %vm999, %v970
  %1004 = vst.msk [vmem:[%s7 + $0x20] sm:$0xff] %vm999, %v971
  %1005 = vst.msk [vmem:[%s7 + $0x28] sm:$0xff] %vm999, %v972
  %1006 = vst.msk [vmem:[%s7 + $0x30] sm:$0xff] %vm999, %v973
  %1007 = vst.msk [vmem:[%s7 + $0x38] sm:$0xff] %vm999, %v974
  %1008 = vst.msk [vmem:[%s7 + $0x40] sm:$0xff] %vm999, %v975
  %1009 = vst.msk [vmem:[%s7 + $0x48] sm:$0xff] %vm999, %v976
  %1010 = vst.msk [vmem:[%s7 + $0x50] sm:$0xff] %vm999, %v977
  %1011 = vst.msk [vmem:[%s7 + $0x58] sm:$0xff] %vm999, %v978
  %1012 = vst.msk [vmem:[%s7 + $0x60] sm:$0xff] %vm999, %v979
  %1013 = vst.msk [vmem:[%s7 + $0x68] sm:$0xff] %vm999, %v980
  %1014 = vst.msk [vmem:[%s7 + $0x70] sm:$0xff] %vm999, %v981
  %1015 = vst.msk [vmem:[%s7 + $0x78] sm:$0xff] %vm999, %v982
  %1016 = vst.msk [vmem:[%s7 + $0x80] sm:$0xff] %vm999, %v983
  %1017 = vst.msk [vmem:[%s7 + $0x88] sm:$0xff] %vm999, %v984
  %1018 = vst.msk [vmem:[%s7 + $0x90] sm:$0xff] %vm999, %v985
  %1019 = vst.msk [vmem:[%s7 + $0x98] sm:$0xff] %vm999, %v986
  %1020 = vst.msk [vmem:[%s7 + $0xa0] sm:$0xff] %vm999, %v987
  %1021 = vst.msk [vmem:[%s7 + $0xa8] sm:$0xff] %vm999, %v988
  %1022 = vst.msk [vmem:[%s7 + $0xb0] sm:$0xff] %vm999, %v989
  %1023 = vst.msk [vmem:[%s7 + $0xb8] sm:$0xff] %vm999, %v990
  %1024 = vst.msk [vmem:[%s7 + $0xc0] sm:$0xff] %vm999, %v991
  %1025 = vst.msk [vmem:[%s7 + $0xc8] sm:$0xff] %vm999, %v992
  %1026 = vst.msk [vmem:[%s7 + $0xd0] sm:$0xff] %vm999, %v993
  %1027 = vst.msk [vmem:[%s7 + $0xd8] sm:$0xff] %vm999, %v994
  %1028 = vst.msk [vmem:[%s7 + $0xe0] sm:$0xff] %vm999, %v995
  %1029 = vst.msk [vmem:[%s7 + $0xe8] sm:$0xff] %vm999, %v996
  %1030 = vst.msk [vmem:[%s7 + $0xf0] sm:$0xff] %vm999, %v997
  %1031 = vst.msk [vmem:[%s7 + $0xf8] sm:$0xff] %vm999, %v998
  // Predicated region
  $region30: #{tpu_custom_call.1} parent=0 // pred_check
    _
  $region31: #{tpu_custom_call.1} parent=0 // pred_check_branch
    %1033 = sbr.rel (0) target = $region33
  $region32: #{tpu_custom_call.1} parent=0 // pred_region
    _
  $region33: #{tpu_custom_call.1} parent=0 // pred_fallthru
    _
  // Predicated region
  $region34: #{tpu_custom_call.1} parent=0 // pred_check
    _
  $region35: #{tpu_custom_call.1} parent=0 // pred_check_branch
    %1035 = sbr.rel (0) target = $region37
  $region36: #{tpu_custom_call.1} parent=0 // pred_region
    _
  $region37: #{tpu_custom_call.1} parent=0 // pred_fallthru
    _

</llo_original>
